<compile_context>
chip_gen: v7x
topology: tpu7x:2x2x1
jax: 0.10.0
libtpu: 0.0.40
codegen_flags: <defaults>
</compile_context>

<pallas_src>
import functools

import jax
import jax.numpy as jnp
from jax import lax
from jax.experimental import pallas as pl
from jax.experimental.pallas import tpu as pltpu


def _round_up(n, m):
    return ((n + m - 1) // m) * m


def _mlp_d_kernel(xT_ref, params_ref, b2_ref, o_ref, *, lane_tile):
    # xT_ref    : (x_dim, TB)        batch on the lane axis (lane-dense)
    # params_ref: (f_pad, x_dim + 2) columns = [w1[:,0..x_dim-1], b1, w2]
    # b2_ref    : (1, 1) in SMEM     second-layer bias (scalar)
    # o_ref     : (1, TB)            lane-dense output
    x_dim = xT_ref.shape[0]
    f_pad = params_ref.shape[0]          # multiple of 8 (zero-padded features)
    tb = o_ref.shape[1]
    n_chunks = f_pad // 8
    b2 = b2_ref[0, 0]

    # Inner lane-tile loop keeps the vreg working set bounded at large TB.
    for off in range(0, tb, lane_tile):
        w = min(lane_tile, tb - off)     # static; multiple of 128

        # Hoisted sublane broadcasts of the x rows for this lane tile:
        # (1, w) -> (8, w), reused by every f-chunk below.
        x_rows = [
            jnp.broadcast_to(xT_ref[k:k + 1, off:off + w], (8, w))
            for k in range(x_dim)
        ]
        # TODO(synk): for x_dim >~ 32 switch layer 1 to an MXU jnp.dot instead
        # of this per-feature VPU unroll.

        def chunk_body(c, acc):
            s = pl.multiple_of(c * 8, 8)
            p = params_ref[pl.ds(s, 8), :]            # (8, x_dim + 2)
            # h[f, b] = b1[f] + sum_k w1[f, k] * x[k, b]   (lane-bcast columns)
            h = p[:, x_dim:x_dim + 1] + p[:, 0:1] * x_rows[0]
            for k in range(1, x_dim):
                h = h + p[:, k:k + 1] * x_rows[k]
            h = jnp.maximum(h, 0.0)                   # ReLU
            # Fused layer 2 partial sum: acc += relu(h) * w2 (per-feature).
            return acc + h * p[:, x_dim + 1:x_dim + 2]

        acc = lax.fori_loop(0, n_chunks, chunk_body,
                            jnp.zeros((8, w), jnp.float32), unroll=True)

        # Single sublane (XLU) reduction + b2, lane-dense store.
        out_tile = jnp.sum(acc, axis=0, keepdims=True) + b2   # (1, w)
        o_ref[:, off:off + w] = out_tile.astype(o_ref.dtype)


def mlp_d_forward(x, w1, b1, w2, b2, *, block_b=2048, x_feature_major=False):
    """Pallas implementation of MLP_D_.forward.

    x : (B, ...) flattened to (B, x_dim)   [or (x_dim, B) if x_feature_major]
    w1: (f_dim, x_dim), b1: (f_dim,)       (PyTorch nn.Linear layout)
    w2: (1, f_dim),     b2: (1,)
    returns: out.squeeze()  -> (B,) for B > 1, scalar for B == 1
    """
    block_b = max(128, (int(block_b) // 128) * 128)   # lane-aligned tile cap

    if x_feature_major:
        xT = jnp.asarray(x, jnp.float32)               # already (x_dim, B)
        x_dim, B = xT.shape
    else:
        B = x.shape[0]
        x2d = jnp.asarray(x, jnp.float32).reshape(B, -1)   # x.view(B, -1)
        x_dim = x2d.shape[1]
        # TODO(synk): this (B, x_dim) -> (x_dim, B) relayout is a separate XLA
        # pass over lane-padded data; feed x feature-major to avoid it.
        xT = x2d.T

    f_dim = w1.shape[0]
    f_pad = _round_up(f_dim, 8)

    # Pack [w1 | b1 | w2] into one resident VMEM block; zero-pad extra feature
    # rows (relu(0) * 0 contributes nothing).
    params = jnp.concatenate(
        [jnp.asarray(w1, jnp.float32).reshape(f_dim, x_dim),
         jnp.asarray(b1, jnp.float32).reshape(f_dim, 1),
         jnp.asarray(w2, jnp.float32).reshape(f_dim, 1)], axis=1)
    if f_pad != f_dim:
        params = jnp.pad(params, ((0, f_pad - f_dim), (0, 0)))

    b2s = jnp.asarray(b2, jnp.float32).reshape(1, 1)

    # Batch tile: multiple of 128 lanes, capped at block_b.  Force >= 2 grid
    # steps when possible so v7x's two TensorCores both get work.
    TB = min(block_b, _round_up(B, 128))
    grid_n = -(-B // TB)
    if grid_n < 2 and B > 128:
        TB = _round_up(-(-B // 2), 128)
        grid_n = -(-B // TB)

    lane_tile = min(TB, 1024)
    kernel = functools.partial(_mlp_d_kernel, lane_tile=lane_tile)

    out = pl.pallas_call(
        kernel,
        out_shape=jax.ShapeDtypeStruct((1, B), jnp.float32),
        grid_spec=pltpu.PrefetchScalarGridSpec(
            num_scalar_prefetch=0,
            grid=(grid_n,),
            in_specs=[
                pl.BlockSpec((x_dim, TB), lambda i: (0, i)),         # x tiles
                pl.BlockSpec((f_pad, x_dim + 2), lambda i: (0, 0)),  # params
                pl.BlockSpec(memory_space=pltpu.MemorySpace.SMEM),   # b2
            ],
            out_specs=pl.BlockSpec((1, TB), lambda i: (0, i)),
        ),
        compiler_params=pltpu.CompilerParams(
            # Batch tiles are independent -> shard across v7x's 2 TensorCores.
            dimension_semantics=("parallel",)),
    )(xT, params, b2s)

    return jnp.squeeze(out)                 # matches torch .squeeze()


def init_params(key, x_dim=2, f_dim=128):
    """Synthetic init matching nn.Linear shapes/layout (uniform +-1/sqrt(fan_in))."""
    k1, k2, k3, k4 = jax.random.split(key, 4)
    bound1 = 1.0 / (x_dim ** 0.5)
    bound2 = 1.0 / (f_dim ** 0.5)
    w1 = jax.random.uniform(k1, (f_dim, x_dim), jnp.float32, -bound1, bound1)
    b1 = jax.random.uniform(k2, (f_dim,), jnp.float32, -bound1, bound1)
    w2 = jax.random.uniform(k3, (1, f_dim), jnp.float32, -bound2, bound2)
    b2 = jax.random.uniform(k4, (1,), jnp.float32, -bound2, bound2)
    return w1, b1, w2, b2


def _ref(x, w1, b1, w2, b2):
    x2d = x.reshape(x.shape[0], -1)
    return jnp.squeeze(jnp.maximum(x2d @ w1.T + b1, 0.0) @ w2.T + b2)


if __name__ == "__main__":
    key = jax.random.PRNGKey(0)
    kx, kx2, kp = jax.random.split(key, 3)

    x_dim, f_dim = 2, 128
    w1, b1, w2, b2 = init_params(kp, x_dim=x_dim, f_dim=f_dim)

    # Small batch (single tile, masked ragged block).
    B = 8
    x = jax.random.normal(kx, (B, x_dim), jnp.float32)
    out = jax.block_until_ready(mlp_d_forward(x, w1, b1, w2, b2))
    ref = _ref(x, w1, b1, w2, b2)
    assert out.shape == (B,)
    assert jnp.allclose(out, ref, atol=1e-5, rtol=1e-5)

    # Larger ragged batch: exercises the >=2-step grid and the tail block.
    B2 = 300
    x2 = jax.random.normal(kx2, (B2, x_dim), jnp.float32)
    out2 = jax.block_until_ready(mlp_d_forward(x2, w1, b1, w2, b2))
    ref2 = _ref(x2, w1, b1, w2, b2)
    assert out2.shape == (B2,)
    assert jnp.allclose(out2, ref2, atol=1e-5, rtol=1e-5)

    print("KERNEL_OK")
</pallas_src>

<mosaic_0001>
module attributes {stable_mosaic.version = 11 : i64} {
  func.func @_mlp_d_kernel(%arg0: i32, %arg1: memref<2x128xf32, #tpu.memory_space<vmem>>, %arg2: memref<128x4xf32, #tpu.memory_space<vmem>>, %arg3: memref<1x1xf32, #tpu.memory_space<smem>>, %arg4: memref<1x128xf32, #tpu.memory_space<vmem>>) attributes {dimension_semantics = [#tpu.dimension_semantics<parallel>], iteration_bounds = array<i64: 1>, scalar_prefetch = 0 : i64, scratch_operands = 0 : i64, tpu.core_type = #tpu.core_type<tc>, window_params = [{transform_indices = @transform_0, window_bounds = array<i64: 2, 128>}, {pipeline_mode = #tpu.pipeline_mode<synchronous>, transform_indices = @transform_1, window_bounds = array<i64: 128, 4>}, {transform_indices = @transform_2, window_bounds = array<i64: 1, 1>}, {transform_indices = @transform_3, window_bounds = array<i64: 1, 128>}]} {
    %c0 = arith.constant 0 : index
    %c0_0 = arith.constant 0 : index
    %0 = memref.load %arg3[%c0, %c0_0] : memref<1x1xf32, #tpu.memory_space<smem>>
    %c0_1 = arith.constant 0 : index
    %c0_2 = arith.constant 0 : index
    %1 = vector.load %arg1[%c0_1, %c0_2] : memref<2x128xf32, #tpu.memory_space<vmem>>, vector<1x128xf32>
    %2 = vector.shape_cast %1 : vector<1x128xf32> to vector<1x128xf32>
    %3 = vector.broadcast %2 : vector<1x128xf32> to vector<8x128xf32>
    %c1 = arith.constant 1 : index
    %c0_3 = arith.constant 0 : index
    %4 = vector.load %arg1[%c1, %c0_3] : memref<2x128xf32, #tpu.memory_space<vmem>>, vector<1x128xf32>
    %5 = vector.shape_cast %4 : vector<1x128xf32> to vector<1x128xf32>
    %6 = vector.broadcast %5 : vector<1x128xf32> to vector<8x128xf32>
    %cst = arith.constant 0.000000e+00 : f32
    %7 = vector.broadcast %cst : f32 to vector<8x128xf32>
    %c0_i32 = arith.constant 0 : i32
    %c8_i32 = arith.constant 8 : i32
    %8 = arith.muli %c0_i32, %c8_i32 : i32
    %9 = tpu.assume_multiple %8, 8 : i32
    %10 = arith.index_cast %9 : i32 to index
    %c0_4 = arith.constant 0 : index
    %11 = vector.load %arg2[%10, %c0_4] : memref<128x4xf32, #tpu.memory_space<vmem>>, vector<8x4xf32>
    %12 = vector.extract_strided_slice %11 {offsets = [0, 2], sizes = [8, 1], strides = [1, 1]} : vector<8x4xf32> to vector<8x1xf32>
    %13 = vector.extract_strided_slice %11 {offsets = [0, 0], sizes = [8, 1], strides = [1, 1]} : vector<8x4xf32> to vector<8x1xf32>
    %14 = vector.broadcast %13 : vector<8x1xf32> to vector<8x128xf32>
    %15 = arith.mulf %14, %3 : vector<8x128xf32>
    %16 = vector.broadcast %12 : vector<8x1xf32> to vector<8x128xf32>
    %17 = arith.addf %16, %15 : vector<8x128xf32>
    %18 = vector.extract_strided_slice %11 {offsets = [0, 1], sizes = [8, 1], strides = [1, 1]} : vector<8x4xf32> to vector<8x1xf32>
    %19 = vector.broadcast %18 : vector<8x1xf32> to vector<8x128xf32>
    %20 = arith.mulf %19, %6 : vector<8x128xf32>
    %21 = arith.addf %17, %20 : vector<8x128xf32>
    %cst_5 = arith.constant 0.000000e+00 : f32
    %22 = vector.broadcast %cst_5 : f32 to vector<8x128xf32>
    %23 = arith.maximumf %21, %22 : vector<8x128xf32>
    %24 = vector.extract_strided_slice %11 {offsets = [0, 3], sizes = [8, 1], strides = [1, 1]} : vector<8x4xf32> to vector<8x1xf32>
    %25 = vector.broadcast %24 : vector<8x1xf32> to vector<8x128xf32>
    %26 = arith.mulf %23, %25 : vector<8x128xf32>
    %27 = arith.addf %7, %26 : vector<8x128xf32>
    %c1_i32 = arith.constant 1 : i32
    %c8_i32_6 = arith.constant 8 : i32
    %28 = arith.muli %c1_i32, %c8_i32_6 : i32
    %29 = tpu.assume_multiple %28, 8 : i32
    %30 = arith.index_cast %29 : i32 to index
    %c0_7 = arith.constant 0 : index
    %31 = vector.load %arg2[%30, %c0_7] : memref<128x4xf32, #tpu.memory_space<vmem>>, vector<8x4xf32>
    %32 = vector.extract_strided_slice %31 {offsets = [0, 2], sizes = [8, 1], strides = [1, 1]} : vector<8x4xf32> to vector<8x1xf32>
    %33 = vector.extract_strided_slice %31 {offsets = [0, 0], sizes = [8, 1], strides = [1, 1]} : vector<8x4xf32> to vector<8x1xf32>
    %34 = vector.broadcast %33 : vector<8x1xf32> to vector<8x128xf32>
    %35 = arith.mulf %34, %3 : vector<8x128xf32>
    %36 = vector.broadcast %32 : vector<8x1xf32> to vector<8x128xf32>
    %37 = arith.addf %36, %35 : vector<8x128xf32>
    %38 = vector.extract_strided_slice %31 {offsets = [0, 1], sizes = [8, 1], strides = [1, 1]} : vector<8x4xf32> to vector<8x1xf32>
    %39 = vector.broadcast %38 : vector<8x1xf32> to vector<8x128xf32>
    %40 = arith.mulf %39, %6 : vector<8x128xf32>
    %41 = arith.addf %37, %40 : vector<8x128xf32>
    %cst_8 = arith.constant 0.000000e+00 : f32
    %42 = vector.broadcast %cst_8 : f32 to vector<8x128xf32>
    %43 = arith.maximumf %41, %42 : vector<8x128xf32>
    %44 = vector.extract_strided_slice %31 {offsets = [0, 3], sizes = [8, 1], strides = [1, 1]} : vector<8x4xf32> to vector<8x1xf32>
    %45 = vector.broadcast %44 : vector<8x1xf32> to vector<8x128xf32>
    %46 = arith.mulf %43, %45 : vector<8x128xf32>
    %47 = arith.addf %27, %46 : vector<8x128xf32>
    %c2_i32 = arith.constant 2 : i32
    %c8_i32_9 = arith.constant 8 : i32
    %48 = arith.muli %c2_i32, %c8_i32_9 : i32
    %49 = tpu.assume_multiple %48, 8 : i32
    %50 = arith.index_cast %49 : i32 to index
    %c0_10 = arith.constant 0 : index
    %51 = vector.load %arg2[%50, %c0_10] : memref<128x4xf32, #tpu.memory_space<vmem>>, vector<8x4xf32>
    %52 = vector.extract_strided_slice %51 {offsets = [0, 2], sizes = [8, 1], strides = [1, 1]} : vector<8x4xf32> to vector<8x1xf32>
    %53 = vector.extract_strided_slice %51 {offsets = [0, 0], sizes = [8, 1], strides = [1, 1]} : vector<8x4xf32> to vector<8x1xf32>
    %54 = vector.broadcast %53 : vector<8x1xf32> to vector<8x128xf32>
    %55 = arith.mulf %54, %3 : vector<8x128xf32>
    %56 = vector.broadcast %52 : vector<8x1xf32> to vector<8x128xf32>
    %57 = arith.addf %56, %55 : vector<8x128xf32>
    %58 = vector.extract_strided_slice %51 {offsets = [0, 1], sizes = [8, 1], strides = [1, 1]} : vector<8x4xf32> to vector<8x1xf32>
    %59 = vector.broadcast %58 : vector<8x1xf32> to vector<8x128xf32>
    %60 = arith.mulf %59, %6 : vector<8x128xf32>
    %61 = arith.addf %57, %60 : vector<8x128xf32>
    %cst_11 = arith.constant 0.000000e+00 : f32
    %62 = vector.broadcast %cst_11 : f32 to vector<8x128xf32>
    %63 = arith.maximumf %61, %62 : vector<8x128xf32>
    %64 = vector.extract_strided_slice %51 {offsets = [0, 3], sizes = [8, 1], strides = [1, 1]} : vector<8x4xf32> to vector<8x1xf32>
    %65 = vector.broadcast %64 : vector<8x1xf32> to vector<8x128xf32>
    %66 = arith.mulf %63, %65 : vector<8x128xf32>
    %67 = arith.addf %47, %66 : vector<8x128xf32>
    %c3_i32 = arith.constant 3 : i32
    %c8_i32_12 = arith.constant 8 : i32
    %68 = arith.muli %c3_i32, %c8_i32_12 : i32
    %69 = tpu.assume_multiple %68, 8 : i32
    %70 = arith.index_cast %69 : i32 to index
    %c0_13 = arith.constant 0 : index
    %71 = vector.load %arg2[%70, %c0_13] : memref<128x4xf32, #tpu.memory_space<vmem>>, vector<8x4xf32>
    %72 = vector.extract_strided_slice %71 {offsets = [0, 2], sizes = [8, 1], strides = [1, 1]} : vector<8x4xf32> to vector<8x1xf32>
    %73 = vector.extract_strided_slice %71 {offsets = [0, 0], sizes = [8, 1], strides = [1, 1]} : vector<8x4xf32> to vector<8x1xf32>
    %74 = vector.broadcast %73 : vector<8x1xf32> to vector<8x128xf32>
    %75 = arith.mulf %74, %3 : vector<8x128xf32>
    %76 = vector.broadcast %72 : vector<8x1xf32> to vector<8x128xf32>
    %77 = arith.addf %76, %75 : vector<8x128xf32>
    %78 = vector.extract_strided_slice %71 {offsets = [0, 1], sizes = [8, 1], strides = [1, 1]} : vector<8x4xf32> to vector<8x1xf32>
    %79 = vector.broadcast %78 : vector<8x1xf32> to vector<8x128xf32>
    %80 = arith.mulf %79, %6 : vector<8x128xf32>
    %81 = arith.addf %77, %80 : vector<8x128xf32>
    %cst_14 = arith.constant 0.000000e+00 : f32
    %82 = vector.broadcast %cst_14 : f32 to vector<8x128xf32>
    %83 = arith.maximumf %81, %82 : vector<8x128xf32>
    %84 = vector.extract_strided_slice %71 {offsets = [0, 3], sizes = [8, 1], strides = [1, 1]} : vector<8x4xf32> to vector<8x1xf32>
    %85 = vector.broadcast %84 : vector<8x1xf32> to vector<8x128xf32>
    %86 = arith.mulf %83, %85 : vector<8x128xf32>
    %87 = arith.addf %67, %86 : vector<8x128xf32>
    %c4_i32 = arith.constant 4 : i32
    %c8_i32_15 = arith.constant 8 : i32
    %88 = arith.muli %c4_i32, %c8_i32_15 : i32
    %89 = tpu.assume_multiple %88, 8 : i32
    %90 = arith.index_cast %89 : i32 to index
    %c0_16 = arith.constant 0 : index
    %91 = vector.load %arg2[%90, %c0_16] : memref<128x4xf32, #tpu.memory_space<vmem>>, vector<8x4xf32>
    %92 = vector.extract_strided_slice %91 {offsets = [0, 2], sizes = [8, 1], strides = [1, 1]} : vector<8x4xf32> to vector<8x1xf32>
    %93 = vector.extract_strided_slice %91 {offsets = [0, 0], sizes = [8, 1], strides = [1, 1]} : vector<8x4xf32> to vector<8x1xf32>
    %94 = vector.broadcast %93 : vector<8x1xf32> to vector<8x128xf32>
    %95 = arith.mulf %94, %3 : vector<8x128xf32>
    %96 = vector.broadcast %92 : vector<8x1xf32> to vector<8x128xf32>
    %97 = arith.addf %96, %95 : vector<8x128xf32>
    %98 = vector.extract_strided_slice %91 {offsets = [0, 1], sizes = [8, 1], strides = [1, 1]} : vector<8x4xf32> to vector<8x1xf32>
    %99 = vector.broadcast %98 : vector<8x1xf32> to vector<8x128xf32>
    %100 = arith.mulf %99, %6 : vector<8x128xf32>
    %101 = arith.addf %97, %100 : vector<8x128xf32>
    %cst_17 = arith.constant 0.000000e+00 : f32
    %102 = vector.broadcast %cst_17 : f32 to vector<8x128xf32>
    %103 = arith.maximumf %101, %102 : vector<8x128xf32>
    %104 = vector.extract_strided_slice %91 {offsets = [0, 3], sizes = [8, 1], strides = [1, 1]} : vector<8x4xf32> to vector<8x1xf32>
    %105 = vector.broadcast %104 : vector<8x1xf32> to vector<8x128xf32>
    %106 = arith.mulf %103, %105 : vector<8x128xf32>
    %107 = arith.addf %87, %106 : vector<8x128xf32>
    %c5_i32 = arith.constant 5 : i32
    %c8_i32_18 = arith.constant 8 : i32
    %108 = arith.muli %c5_i32, %c8_i32_18 : i32
    %109 = tpu.assume_multiple %108, 8 : i32
    %110 = arith.index_cast %109 : i32 to index
    %c0_19 = arith.constant 0 : index
    %111 = vector.load %arg2[%110, %c0_19] : memref<128x4xf32, #tpu.memory_space<vmem>>, vector<8x4xf32>
    %112 = vector.extract_strided_slice %111 {offsets = [0, 2], sizes = [8, 1], strides = [1, 1]} : vector<8x4xf32> to vector<8x1xf32>
    %113 = vector.extract_strided_slice %111 {offsets = [0, 0], sizes = [8, 1], strides = [1, 1]} : vector<8x4xf32> to vector<8x1xf32>
    %114 = vector.broadcast %113 : vector<8x1xf32> to vector<8x128xf32>
    %115 = arith.mulf %114, %3 : vector<8x128xf32>
    %116 = vector.broadcast %112 : vector<8x1xf32> to vector<8x128xf32>
    %117 = arith.addf %116, %115 : vector<8x128xf32>
    %118 = vector.extract_strided_slice %111 {offsets = [0, 1], sizes = [8, 1], strides = [1, 1]} : vector<8x4xf32> to vector<8x1xf32>
    %119 = vector.broadcast %118 : vector<8x1xf32> to vector<8x128xf32>
    %120 = arith.mulf %119, %6 : vector<8x128xf32>
    %121 = arith.addf %117, %120 : vector<8x128xf32>
    %cst_20 = arith.constant 0.000000e+00 : f32
    %122 = vector.broadcast %cst_20 : f32 to vector<8x128xf32>
    %123 = arith.maximumf %121, %122 : vector<8x128xf32>
    %124 = vector.extract_strided_slice %111 {offsets = [0, 3], sizes = [8, 1], strides = [1, 1]} : vector<8x4xf32> to vector<8x1xf32>
    %125 = vector.broadcast %124 : vector<8x1xf32> to vector<8x128xf32>
    %126 = arith.mulf %123, %125 : vector<8x128xf32>
    %127 = arith.addf %107, %126 : vector<8x128xf32>
    %c6_i32 = arith.constant 6 : i32
    %c8_i32_21 = arith.constant 8 : i32
    %128 = arith.muli %c6_i32, %c8_i32_21 : i32
    %129 = tpu.assume_multiple %128, 8 : i32
    %130 = arith.index_cast %129 : i32 to index
    %c0_22 = arith.constant 0 : index
    %131 = vector.load %arg2[%130, %c0_22] : memref<128x4xf32, #tpu.memory_space<vmem>>, vector<8x4xf32>
    %132 = vector.extract_strided_slice %131 {offsets = [0, 2], sizes = [8, 1], strides = [1, 1]} : vector<8x4xf32> to vector<8x1xf32>
    %133 = vector.extract_strided_slice %131 {offsets = [0, 0], sizes = [8, 1], strides = [1, 1]} : vector<8x4xf32> to vector<8x1xf32>
    %134 = vector.broadcast %133 : vector<8x1xf32> to vector<8x128xf32>
    %135 = arith.mulf %134, %3 : vector<8x128xf32>
    %136 = vector.broadcast %132 : vector<8x1xf32> to vector<8x128xf32>
    %137 = arith.addf %136, %135 : vector<8x128xf32>
    %138 = vector.extract_strided_slice %131 {offsets = [0, 1], sizes = [8, 1], strides = [1, 1]} : vector<8x4xf32> to vector<8x1xf32>
    %139 = vector.broadcast %138 : vector<8x1xf32> to vector<8x128xf32>
    %140 = arith.mulf %139, %6 : vector<8x128xf32>
    %141 = arith.addf %137, %140 : vector<8x128xf32>
    %cst_23 = arith.constant 0.000000e+00 : f32
    %142 = vector.broadcast %cst_23 : f32 to vector<8x128xf32>
    %143 = arith.maximumf %141, %142 : vector<8x128xf32>
    %144 = vector.extract_strided_slice %131 {offsets = [0, 3], sizes = [8, 1], strides = [1, 1]} : vector<8x4xf32> to vector<8x1xf32>
    %145 = vector.broadcast %144 : vector<8x1xf32> to vector<8x128xf32>
    %146 = arith.mulf %143, %145 : vector<8x128xf32>
    %147 = arith.addf %127, %146 : vector<8x128xf32>
    %c7_i32 = arith.constant 7 : i32
    %c8_i32_24 = arith.constant 8 : i32
    %148 = arith.muli %c7_i32, %c8_i32_24 : i32
    %149 = tpu.assume_multiple %148, 8 : i32
    %150 = arith.index_cast %149 : i32 to index
    %c0_25 = arith.constant 0 : index
    %151 = vector.load %arg2[%150, %c0_25] : memref<128x4xf32, #tpu.memory_space<vmem>>, vector<8x4xf32>
    %152 = vector.extract_strided_slice %151 {offsets = [0, 2], sizes = [8, 1], strides = [1, 1]} : vector<8x4xf32> to vector<8x1xf32>
    %153 = vector.extract_strided_slice %151 {offsets = [0, 0], sizes = [8, 1], strides = [1, 1]} : vector<8x4xf32> to vector<8x1xf32>
    %154 = vector.broadcast %153 : vector<8x1xf32> to vector<8x128xf32>
    %155 = arith.mulf %154, %3 : vector<8x128xf32>
    %156 = vector.broadcast %152 : vector<8x1xf32> to vector<8x128xf32>
    %157 = arith.addf %156, %155 : vector<8x128xf32>
    %158 = vector.extract_strided_slice %151 {offsets = [0, 1], sizes = [8, 1], strides = [1, 1]} : vector<8x4xf32> to vector<8x1xf32>
    %159 = vector.broadcast %158 : vector<8x1xf32> to vector<8x128xf32>
    %160 = arith.mulf %159, %6 : vector<8x128xf32>
    %161 = arith.addf %157, %160 : vector<8x128xf32>
    %cst_26 = arith.constant 0.000000e+00 : f32
    %162 = vector.broadcast %cst_26 : f32 to vector<8x128xf32>
    %163 = arith.maximumf %161, %162 : vector<8x128xf32>
    %164 = vector.extract_strided_slice %151 {offsets = [0, 3], sizes = [8, 1], strides = [1, 1]} : vector<8x4xf32> to vector<8x1xf32>
    %165 = vector.broadcast %164 : vector<8x1xf32> to vector<8x128xf32>
    %166 = arith.mulf %163, %165 : vector<8x128xf32>
    %167 = arith.addf %147, %166 : vector<8x128xf32>
    %c8_i32_27 = arith.constant 8 : i32
    %c8_i32_28 = arith.constant 8 : i32
    %168 = arith.muli %c8_i32_27, %c8_i32_28 : i32
    %169 = tpu.assume_multiple %168, 8 : i32
    %170 = arith.index_cast %169 : i32 to index
    %c0_29 = arith.constant 0 : index
    %171 = vector.load %arg2[%170, %c0_29] : memref<128x4xf32, #tpu.memory_space<vmem>>, vector<8x4xf32>
    %172 = vector.extract_strided_slice %171 {offsets = [0, 2], sizes = [8, 1], strides = [1, 1]} : vector<8x4xf32> to vector<8x1xf32>
    %173 = vector.extract_strided_slice %171 {offsets = [0, 0], sizes = [8, 1], strides = [1, 1]} : vector<8x4xf32> to vector<8x1xf32>
    %174 = vector.broadcast %173 : vector<8x1xf32> to vector<8x128xf32>
    %175 = arith.mulf %174, %3 : vector<8x128xf32>
    %176 = vector.broadcast %172 : vector<8x1xf32> to vector<8x128xf32>
    %177 = arith.addf %176, %175 : vector<8x128xf32>
    %178 = vector.extract_strided_slice %171 {offsets = [0, 1], sizes = [8, 1], strides = [1, 1]} : vector<8x4xf32> to vector<8x1xf32>
    %179 = vector.broadcast %178 : vector<8x1xf32> to vector<8x128xf32>
    %180 = arith.mulf %179, %6 : vector<8x128xf32>
    %181 = arith.addf %177, %180 : vector<8x128xf32>
    %cst_30 = arith.constant 0.000000e+00 : f32
    %182 = vector.broadcast %cst_30 : f32 to vector<8x128xf32>
    %183 = arith.maximumf %181, %182 : vector<8x128xf32>
    %184 = vector.extract_strided_slice %171 {offsets = [0, 3], sizes = [8, 1], strides = [1, 1]} : vector<8x4xf32> to vector<8x1xf32>
    %185 = vector.broadcast %184 : vector<8x1xf32> to vector<8x128xf32>
    %186 = arith.mulf %183, %185 : vector<8x128xf32>
    %187 = arith.addf %167, %186 : vector<8x128xf32>
    %c9_i32 = arith.constant 9 : i32
    %c8_i32_31 = arith.constant 8 : i32
    %188 = arith.muli %c9_i32, %c8_i32_31 : i32
    %189 = tpu.assume_multiple %188, 8 : i32
    %190 = arith.index_cast %189 : i32 to index
    %c0_32 = arith.constant 0 : index
    %191 = vector.load %arg2[%190, %c0_32] : memref<128x4xf32, #tpu.memory_space<vmem>>, vector<8x4xf32>
    %192 = vector.extract_strided_slice %191 {offsets = [0, 2], sizes = [8, 1], strides = [1, 1]} : vector<8x4xf32> to vector<8x1xf32>
    %193 = vector.extract_strided_slice %191 {offsets = [0, 0], sizes = [8, 1], strides = [1, 1]} : vector<8x4xf32> to vector<8x1xf32>
    %194 = vector.broadcast %193 : vector<8x1xf32> to vector<8x128xf32>
    %195 = arith.mulf %194, %3 : vector<8x128xf32>
    %196 = vector.broadcast %192 : vector<8x1xf32> to vector<8x128xf32>
    %197 = arith.addf %196, %195 : vector<8x128xf32>
    %198 = vector.extract_strided_slice %191 {offsets = [0, 1], sizes = [8, 1], strides = [1, 1]} : vector<8x4xf32> to vector<8x1xf32>
    %199 = vector.broadcast %198 : vector<8x1xf32> to vector<8x128xf32>
    %200 = arith.mulf %199, %6 : vector<8x128xf32>
    %201 = arith.addf %197, %200 : vector<8x128xf32>
    %cst_33 = arith.constant 0.000000e+00 : f32
    %202 = vector.broadcast %cst_33 : f32 to vector<8x128xf32>
    %203 = arith.maximumf %201, %202 : vector<8x128xf32>
    %204 = vector.extract_strided_slice %191 {offsets = [0, 3], sizes = [8, 1], strides = [1, 1]} : vector<8x4xf32> to vector<8x1xf32>
    %205 = vector.broadcast %204 : vector<8x1xf32> to vector<8x128xf32>
    %206 = arith.mulf %203, %205 : vector<8x128xf32>
    %207 = arith.addf %187, %206 : vector<8x128xf32>
    %c10_i32 = arith.constant 10 : i32
    %c8_i32_34 = arith.constant 8 : i32
    %208 = arith.muli %c10_i32, %c8_i32_34 : i32
    %209 = tpu.assume_multiple %208, 8 : i32
    %210 = arith.index_cast %209 : i32 to index
    %c0_35 = arith.constant 0 : index
    %211 = vector.load %arg2[%210, %c0_35] : memref<128x4xf32, #tpu.memory_space<vmem>>, vector<8x4xf32>
    %212 = vector.extract_strided_slice %211 {offsets = [0, 2], sizes = [8, 1], strides = [1, 1]} : vector<8x4xf32> to vector<8x1xf32>
    %213 = vector.extract_strided_slice %211 {offsets = [0, 0], sizes = [8, 1], strides = [1, 1]} : vector<8x4xf32> to vector<8x1xf32>
    %214 = vector.broadcast %213 : vector<8x1xf32> to vector<8x128xf32>
    %215 = arith.mulf %214, %3 : vector<8x128xf32>
    %216 = vector.broadcast %212 : vector<8x1xf32> to vector<8x128xf32>
    %217 = arith.addf %216, %215 : vector<8x128xf32>
    %218 = vector.extract_strided_slice %211 {offsets = [0, 1], sizes = [8, 1], strides = [1, 1]} : vector<8x4xf32> to vector<8x1xf32>
    %219 = vector.broadcast %218 : vector<8x1xf32> to vector<8x128xf32>
    %220 = arith.mulf %219, %6 : vector<8x128xf32>
    %221 = arith.addf %217, %220 : vector<8x128xf32>
    %cst_36 = arith.constant 0.000000e+00 : f32
    %222 = vector.broadcast %cst_36 : f32 to vector<8x128xf32>
    %223 = arith.maximumf %221, %222 : vector<8x128xf32>
    %224 = vector.extract_strided_slice %211 {offsets = [0, 3], sizes = [8, 1], strides = [1, 1]} : vector<8x4xf32> to vector<8x1xf32>
    %225 = vector.broadcast %224 : vector<8x1xf32> to vector<8x128xf32>
    %226 = arith.mulf %223, %225 : vector<8x128xf32>
    %227 = arith.addf %207, %226 : vector<8x128xf32>
    %c11_i32 = arith.constant 11 : i32
    %c8_i32_37 = arith.constant 8 : i32
    %228 = arith.muli %c11_i32, %c8_i32_37 : i32
    %229 = tpu.assume_multiple %228, 8 : i32
    %230 = arith.index_cast %229 : i32 to index
    %c0_38 = arith.constant 0 : index
    %231 = vector.load %arg2[%230, %c0_38] : memref<128x4xf32, #tpu.memory_space<vmem>>, vector<8x4xf32>
    %232 = vector.extract_strided_slice %231 {offsets = [0, 2], sizes = [8, 1], strides = [1, 1]} : vector<8x4xf32> to vector<8x1xf32>
    %233 = vector.extract_strided_slice %231 {offsets = [0, 0], sizes = [8, 1], strides = [1, 1]} : vector<8x4xf32> to vector<8x1xf32>
    %234 = vector.broadcast %233 : vector<8x1xf32> to vector<8x128xf32>
    %235 = arith.mulf %234, %3 : vector<8x128xf32>
    %236 = vector.broadcast %232 : vector<8x1xf32> to vector<8x128xf32>
    %237 = arith.addf %236, %235 : vector<8x128xf32>
    %238 = vector.extract_strided_slice %231 {offsets = [0, 1], sizes = [8, 1], strides = [1, 1]} : vector<8x4xf32> to vector<8x1xf32>
    %239 = vector.broadcast %238 : vector<8x1xf32> to vector<8x128xf32>
    %240 = arith.mulf %239, %6 : vector<8x128xf32>
    %241 = arith.addf %237, %240 : vector<8x128xf32>
    %cst_39 = arith.constant 0.000000e+00 : f32
    %242 = vector.broadcast %cst_39 : f32 to vector<8x128xf32>
    %243 = arith.maximumf %241, %242 : vector<8x128xf32>
    %244 = vector.extract_strided_slice %231 {offsets = [0, 3], sizes = [8, 1], strides = [1, 1]} : vector<8x4xf32> to vector<8x1xf32>
    %245 = vector.broadcast %244 : vector<8x1xf32> to vector<8x128xf32>
    %246 = arith.mulf %243, %245 : vector<8x128xf32>
    %247 = arith.addf %227, %246 : vector<8x128xf32>
    %c12_i32 = arith.constant 12 : i32
    %c8_i32_40 = arith.constant 8 : i32
    %248 = arith.muli %c12_i32, %c8_i32_40 : i32
    %249 = tpu.assume_multiple %248, 8 : i32
    %250 = arith.index_cast %249 : i32 to index
    %c0_41 = arith.constant 0 : index
    %251 = vector.load %arg2[%250, %c0_41] : memref<128x4xf32, #tpu.memory_space<vmem>>, vector<8x4xf32>
    %252 = vector.extract_strided_slice %251 {offsets = [0, 2], sizes = [8, 1], strides = [1, 1]} : vector<8x4xf32> to vector<8x1xf32>
    %253 = vector.extract_strided_slice %251 {offsets = [0, 0], sizes = [8, 1], strides = [1, 1]} : vector<8x4xf32> to vector<8x1xf32>
    %254 = vector.broadcast %253 : vector<8x1xf32> to vector<8x128xf32>
    %255 = arith.mulf %254, %3 : vector<8x128xf32>
    %256 = vector.broadcast %252 : vector<8x1xf32> to vector<8x128xf32>
    %257 = arith.addf %256, %255 : vector<8x128xf32>
    %258 = vector.extract_strided_slice %251 {offsets = [0, 1], sizes = [8, 1], strides = [1, 1]} : vector<8x4xf32> to vector<8x1xf32>
    %259 = vector.broadcast %258 : vector<8x1xf32> to vector<8x128xf32>
    %260 = arith.mulf %259, %6 : vector<8x128xf32>
    %261 = arith.addf %257, %260 : vector<8x128xf32>
    %cst_42 = arith.constant 0.000000e+00 : f32
    %262 = vector.broadcast %cst_42 : f32 to vector<8x128xf32>
    %263 = arith.maximumf %261, %262 : vector<8x128xf32>
    %264 = vector.extract_strided_slice %251 {offsets = [0, 3], sizes = [8, 1], strides = [1, 1]} : vector<8x4xf32> to vector<8x1xf32>
    %265 = vector.broadcast %264 : vector<8x1xf32> to vector<8x128xf32>
    %266 = arith.mulf %263, %265 : vector<8x128xf32>
    %267 = arith.addf %247, %266 : vector<8x128xf32>
    %c13_i32 = arith.constant 13 : i32
    %c8_i32_43 = arith.constant 8 : i32
    %268 = arith.muli %c13_i32, %c8_i32_43 : i32
    %269 = tpu.assume_multiple %268, 8 : i32
    %270 = arith.index_cast %269 : i32 to index
    %c0_44 = arith.constant 0 : index
    %271 = vector.load %arg2[%270, %c0_44] : memref<128x4xf32, #tpu.memory_space<vmem>>, vector<8x4xf32>
    %272 = vector.extract_strided_slice %271 {offsets = [0, 2], sizes = [8, 1], strides = [1, 1]} : vector<8x4xf32> to vector<8x1xf32>
    %273 = vector.extract_strided_slice %271 {offsets = [0, 0], sizes = [8, 1], strides = [1, 1]} : vector<8x4xf32> to vector<8x1xf32>
    %274 = vector.broadcast %273 : vector<8x1xf32> to vector<8x128xf32>
    %275 = arith.mulf %274, %3 : vector<8x128xf32>
    %276 = vector.broadcast %272 : vector<8x1xf32> to vector<8x128xf32>
    %277 = arith.addf %276, %275 : vector<8x128xf32>
    %278 = vector.extract_strided_slice %271 {offsets = [0, 1], sizes = [8, 1], strides = [1, 1]} : vector<8x4xf32> to vector<8x1xf32>
    %279 = vector.broadcast %278 : vector<8x1xf32> to vector<8x128xf32>
    %280 = arith.mulf %279, %6 : vector<8x128xf32>
    %281 = arith.addf %277, %280 : vector<8x128xf32>
    %cst_45 = arith.constant 0.000000e+00 : f32
    %282 = vector.broadcast %cst_45 : f32 to vector<8x128xf32>
    %283 = arith.maximumf %281, %282 : vector<8x128xf32>
    %284 = vector.extract_strided_slice %271 {offsets = [0, 3], sizes = [8, 1], strides = [1, 1]} : vector<8x4xf32> to vector<8x1xf32>
    %285 = vector.broadcast %284 : vector<8x1xf32> to vector<8x128xf32>
    %286 = arith.mulf %283, %285 : vector<8x128xf32>
    %287 = arith.addf %267, %286 : vector<8x128xf32>
    %c14_i32 = arith.constant 14 : i32
    %c8_i32_46 = arith.constant 8 : i32
    %288 = arith.muli %c14_i32, %c8_i32_46 : i32
    %289 = tpu.assume_multiple %288, 8 : i32
    %290 = arith.index_cast %289 : i32 to index
    %c0_47 = arith.constant 0 : index
    %291 = vector.load %arg2[%290, %c0_47] : memref<128x4xf32, #tpu.memory_space<vmem>>, vector<8x4xf32>
    %292 = vector.extract_strided_slice %291 {offsets = [0, 2], sizes = [8, 1], strides = [1, 1]} : vector<8x4xf32> to vector<8x1xf32>
    %293 = vector.extract_strided_slice %291 {offsets = [0, 0], sizes = [8, 1], strides = [1, 1]} : vector<8x4xf32> to vector<8x1xf32>
    %294 = vector.broadcast %293 : vector<8x1xf32> to vector<8x128xf32>
    %295 = arith.mulf %294, %3 : vector<8x128xf32>
    %296 = vector.broadcast %292 : vector<8x1xf32> to vector<8x128xf32>
    %297 = arith.addf %296, %295 : vector<8x128xf32>
    %298 = vector.extract_strided_slice %291 {offsets = [0, 1], sizes = [8, 1], strides = [1, 1]} : vector<8x4xf32> to vector<8x1xf32>
    %299 = vector.broadcast %298 : vector<8x1xf32> to vector<8x128xf32>
    %300 = arith.mulf %299, %6 : vector<8x128xf32>
    %301 = arith.addf %297, %300 : vector<8x128xf32>
    %cst_48 = arith.constant 0.000000e+00 : f32
    %302 = vector.broadcast %cst_48 : f32 to vector<8x128xf32>
    %303 = arith.maximumf %301, %302 : vector<8x128xf32>
    %304 = vector.extract_strided_slice %291 {offsets = [0, 3], sizes = [8, 1], strides = [1, 1]} : vector<8x4xf32> to vector<8x1xf32>
    %305 = vector.broadcast %304 : vector<8x1xf32> to vector<8x128xf32>
    %306 = arith.mulf %303, %305 : vector<8x128xf32>
    %307 = arith.addf %287, %306 : vector<8x128xf32>
    %c15_i32 = arith.constant 15 : i32
    %c8_i32_49 = arith.constant 8 : i32
    %308 = arith.muli %c15_i32, %c8_i32_49 : i32
    %309 = tpu.assume_multiple %308, 8 : i32
    %310 = arith.index_cast %309 : i32 to index
    %c0_50 = arith.constant 0 : index
    %311 = vector.load %arg2[%310, %c0_50] : memref<128x4xf32, #tpu.memory_space<vmem>>, vector<8x4xf32>
    %312 = vector.extract_strided_slice %311 {offsets = [0, 2], sizes = [8, 1], strides = [1, 1]} : vector<8x4xf32> to vector<8x1xf32>
    %313 = vector.extract_strided_slice %311 {offsets = [0, 0], sizes = [8, 1], strides = [1, 1]} : vector<8x4xf32> to vector<8x1xf32>
    %314 = vector.broadcast %313 : vector<8x1xf32> to vector<8x128xf32>
    %315 = arith.mulf %314, %3 : vector<8x128xf32>
    %316 = vector.broadcast %312 : vector<8x1xf32> to vector<8x128xf32>
    %317 = arith.addf %316, %315 : vector<8x128xf32>
    %318 = vector.extract_strided_slice %311 {offsets = [0, 1], sizes = [8, 1], strides = [1, 1]} : vector<8x4xf32> to vector<8x1xf32>
    %319 = vector.broadcast %318 : vector<8x1xf32> to vector<8x128xf32>
    %320 = arith.mulf %319, %6 : vector<8x128xf32>
    %321 = arith.addf %317, %320 : vector<8x128xf32>
    %cst_51 = arith.constant 0.000000e+00 : f32
    %322 = vector.broadcast %cst_51 : f32 to vector<8x128xf32>
    %323 = arith.maximumf %321, %322 : vector<8x128xf32>
    %324 = vector.extract_strided_slice %311 {offsets = [0, 3], sizes = [8, 1], strides = [1, 1]} : vector<8x4xf32> to vector<8x1xf32>
    %325 = vector.broadcast %324 : vector<8x1xf32> to vector<8x128xf32>
    %326 = arith.mulf %323, %325 : vector<8x128xf32>
    %327 = arith.addf %307, %326 : vector<8x128xf32>
    %c16_i32 = arith.constant 16 : i32
    %cst_52 = arith.constant dense<0.000000e+00> : vector<128xf32>
    %328 = vector.multi_reduction <add>, %327, %cst_52 [0] : vector<8x128xf32> to vector<128xf32>
    %329 = vector.shape_cast %328 : vector<128xf32> to vector<1x128xf32>
    %330 = vector.broadcast %0 : f32 to vector<1x128xf32>
    %331 = arith.addf %329, %330 : vector<1x128xf32>
    %c0_53 = arith.constant 0 : index
    %c0_54 = arith.constant 0 : index
    %332 = vector.load %arg4[%c0_53, %c0_54] : memref<1x128xf32, #tpu.memory_space<vmem>>, vector<1x128xf32>
    tpu.vector_store %arg4[%c0_53, %c0_54], %331 {strides = array<i32>} : memref<1x128xf32, #tpu.memory_space<vmem>>, vector<1x128xf32>,
    return
  }
  func.func @transform_0(%arg0: i32) -> (i32, i32) {
    %c0_i32 = arith.constant 0 : i32
    %c0_i32_0 = arith.constant 0 : i32
    return %c0_i32, %arg0 : i32, i32
  }
  func.func @transform_1(%arg0: i32) -> (i32, i32) {
    %c0_i32 = arith.constant 0 : i32
    %c0_i32_0 = arith.constant 0 : i32
    %c0_i32_1 = arith.constant 0 : i32
    return %c0_i32, %c0_i32_0 : i32, i32
  }
  func.func @transform_2(%arg0: i32) -> (i32, i32) {
    %c0_i32 = arith.constant 0 : i32
    %c0_i32_0 = arith.constant 0 : i32
    %c0_i32_1 = arith.constant 0 : i32
    return %c0_i32, %c0_i32_0 : i32, i32
  }
  func.func @transform_3(%arg0: i32) -> (i32, i32) {
    %c0_i32 = arith.constant 0 : i32
    %c0_i32_0 = arith.constant 0 : i32
    return %c0_i32, %arg0 : i32, i32
  }
}

</mosaic_0001>

<llo_original>
// kernel: tpu_custom_call.1
$region0: #{tpu_custom_call.1}
  #allocation0 [shape = 'u32[]', space=smem, size = 0x4, offset = 0x4, fixed_abs, tag = 'smem constant byte address 0x4 - core index']
  #allocation1 [shape = 'u32[144,128]{1,0:T(1,128)}', space=vmem, size = 0x12000, scoped, tag = 'internal scratch']
  #allocation2 [shape = 'f32[1,1]{1,0:T(1,128)S(6)}', space=smem, size = 0x200, scoped, tag = 'scoped memory for tpu_custom_call.1']
  %s0 = inlined_call_operand.vmem [shape: f32[2,8], index: 0, kind: input, shape index: {}]
  %s1 = inlined_call_operand.vmem [shape: f32[128,4], index: 1, kind: input, shape index: {}]
  %s2 = inlined_call_operand.<no memory space> [shape: f32[1,1], index: 2, kind: input, shape index: {}]
  %s3 = inlined_call_operand.hbm [shape: f32[1,8], index: 3, kind: output, shape index: {}]
  %s4 = sld [smem:[#allocation0]]
  $region22: #{tpu_custom_call.1} parent=0
    _
  %s6 = ssub.s32 1, %s4
  %s7 = scalar_select 0, %s6, %s4
  %8 = sst [smem:[#allocation2]] %s2
  $region1: #{tpu_custom_call.1} parent=0
    #allocation3 [shape = 'u8[512]{0}', space=vmem, size = 0x400, scoped, tag = 'output window, operand 0, single buffered']
    #allocation4 [shape = 's32[1]{0}', space=sflag, size = 0x4, scoped, tag = 'scoped memory for tpu_custom_call.1']
    %9 = vsyncpa [#allocation4], 0
    // Predicated region
    $region2: #{tpu_custom_call.1} parent=1 // pred_check
      _
    $region3: #{tpu_custom_call.1} parent=1 // pred_check_branch
      %11 = sbr.rel (0) target = $region5
    $region4: #{tpu_custom_call.1} parent=1 // pred_region
      _
    $region5: #{tpu_custom_call.1} parent=1 // pred_fallthru
      _
    // Predicated region
    $region6: #{tpu_custom_call.1} parent=1 // pred_check
      _
    $region7: #{tpu_custom_call.1} parent=1 // pred_check_branch
      %13 = sbr.rel (0) target = $region9
    $region8: #{tpu_custom_call.1} parent=1 // pred_region
      _
    $region9: #{tpu_custom_call.1} parent=1 // pred_fallthru
      _
    // Predicated region
    $region10: #{tpu_custom_call.1} parent=1 // pred_check
      _
    $region11: #{tpu_custom_call.1} parent=1 // pred_check_branch
      %15 = sbr.rel (0) target = $region13
    $region12: #{tpu_custom_call.1} parent=1 // pred_region
      _
    $region13: #{tpu_custom_call.1} parent=1 // pred_fallthru
      _
    %s16 = sld [smem:[#allocation2]]
    %v17 = vld [vmem:[%s0] sm:$0x1]
    %v18 = vlaneseq
    %v19 = vshrl.u32 %v18, 7
    %v20 = vsub.s32 0, %v19
    %v21 = vrot.slane %v17, %v20
    %v22 = vld [vmem:[%s0 + $0x1] sm:$0x1]
    %v23 = vlaneseq
    %v24 = vshrl.u32 %v23, 7
    %v25 = vsub.s32 0, %v24
    %v26 = vrot.slane %v22, %v25
    %v27 = vld [vmem:[%s1] sm:$0xff]
    %29 = vset.pattern.permute.xlu0 0
    %30 = vperm.xlu0 %29, %v27
    %v31 = vpop.permute.xlu0 %30
    %v33 = vmul.f32 %v31, %v21
    %34 = vset.pattern.permute.xlu0 2
    %35 = vperm.xlu0 %34, %v27
    %v36 = vpop.permute.xlu0 %35
    %v38 = vadd.f32 %v36, %v33
    %39 = vset.pattern.permute.xlu0 1
    %40 = vperm.xlu0 %39, %v27
    %v41 = vpop.permute.xlu0 %40
    %v43 = vmul.f32 %v41, %v26
    %v44 = vadd.f32 %v38, %v43
    %v45 = vmax.f32 %v44, 0.0
    %46 = vset.pattern.permute.xlu0 3
    %47 = vperm.xlu0 %46, %v27
    %v48 = vpop.permute.xlu0 %47
    %v50 = vmul.f32 %v45, %v48
    %v51 = vadd.f32 %v50, 0.0
    %s52 = scalar_lea.vmem %s1, 8
    %v53 = vld [vmem:[%s52] sm:$0xff]
    %55 = vset.pattern.permute.xlu0 0
    %56 = vperm.xlu0 %55, %v53
    %v57 = vpop.permute.xlu0 %56
    %v59 = vmul.f32 %v57, %v21
    %60 = vset.pattern.permute.xlu0 2
    %61 = vperm.xlu0 %60, %v53
    %v62 = vpop.permute.xlu0 %61
    %v64 = vadd.f32 %v62, %v59
    %65 = vset.pattern.permute.xlu0 1
    %66 = vperm.xlu0 %65, %v53
    %v67 = vpop.permute.xlu0 %66
    %v69 = vmul.f32 %v67, %v26
    %v70 = vadd.f32 %v64, %v69
    %v71 = vmax.f32 %v70, 0.0
    %72 = vset.pattern.permute.xlu0 3
    %73 = vperm.xlu0 %72, %v53
    %v74 = vpop.permute.xlu0 %73
    %v76 = vmul.f32 %v71, %v74
    %v77 = vadd.f32 %v51, %v76
    %s78 = scalar_lea.vmem %s1, 16
    %v79 = vld [vmem:[%s78] sm:$0xff]
    %81 = vset.pattern.permute.xlu0 0
    %82 = vperm.xlu0 %81, %v79
    %v83 = vpop.permute.xlu0 %82
    %v85 = vmul.f32 %v83, %v21
    %86 = vset.pattern.permute.xlu0 2
    %87 = vperm.xlu0 %86, %v79
    %v88 = vpop.permute.xlu0 %87
    %v90 = vadd.f32 %v88, %v85
    %91 = vset.pattern.permute.xlu0 1
    %92 = vperm.xlu0 %91, %v79
    %v93 = vpop.permute.xlu0 %92
    %v95 = vmul.f32 %v93, %v26
    %v96 = vadd.f32 %v90, %v95
    %v97 = vmax.f32 %v96, 0.0
    %98 = vset.pattern.permute.xlu0 3
    %99 = vperm.xlu0 %98, %v79
    %v100 = vpop.permute.xlu0 %99
    %v102 = vmul.f32 %v97, %v100
    %v103 = vadd.f32 %v77, %v102
    %s104 = scalar_lea.vmem %s1, 24
    %v105 = vld [vmem:[%s104] sm:$0xff]
    %107 = vset.pattern.permute.xlu0 0
    %108 = vperm.xlu0 %107, %v105
    %v109 = vpop.permute.xlu0 %108
    %v111 = vmul.f32 %v109, %v21
    %112 = vset.pattern.permute.xlu0 2
    %113 = vperm.xlu0 %112, %v105
    %v114 = vpop.permute.xlu0 %113
    %v116 = vadd.f32 %v114, %v111
    %117 = vset.pattern.permute.xlu0 1
    %118 = vperm.xlu0 %117, %v105
    %v119 = vpop.permute.xlu0 %118
    %v121 = vmul.f32 %v119, %v26
    %v122 = vadd.f32 %v116, %v121
    %v123 = vmax.f32 %v122, 0.0
    %124 = vset.pattern.permute.xlu0 3
    %125 = vperm.xlu0 %124, %v105
    %v126 = vpop.permute.xlu0 %125
    %v128 = vmul.f32 %v123, %v126
    %v129 = vadd.f32 %v103, %v128
    %s130 = scalar_lea.vmem %s1, 32
    %v131 = vld [vmem:[%s130] sm:$0xff]
    %133 = vset.pattern.permute.xlu0 0
    %134 = vperm.xlu0 %133, %v131
    %v135 = vpop.permute.xlu0 %134
    %v137 = vmul.f32 %v135, %v21
    %138 = vset.pattern.permute.xlu0 2
    %139 = vperm.xlu0 %138, %v131
    %v140 = vpop.permute.xlu0 %139
    %v142 = vadd.f32 %v140, %v137
    %143 = vset.pattern.permute.xlu0 1
    %144 = vperm.xlu0 %143, %v131
    %v145 = vpop.permute.xlu0 %144
    %v147 = vmul.f32 %v145, %v26
    %v148 = vadd.f32 %v142, %v147
    %v149 = vmax.f32 %v148, 0.0
    %150 = vset.pattern.permute.xlu0 3
    %151 = vperm.xlu0 %150, %v131
    %v152 = vpop.permute.xlu0 %151
    %v154 = vmul.f32 %v149, %v152
    %v155 = vadd.f32 %v129, %v154
    %s156 = scalar_lea.vmem %s1, 40
    %v157 = vld [vmem:[%s156] sm:$0xff]
    %159 = vset.pattern.permute.xlu0 0
    %160 = vperm.xlu0 %159, %v157
    %v161 = vpop.permute.xlu0 %160
    %v163 = vmul.f32 %v161, %v21
    %164 = vset.pattern.permute.xlu0 2
    %165 = vperm.xlu0 %164, %v157
    %v166 = vpop.permute.xlu0 %165
    %v168 = vadd.f32 %v166, %v163
    %169 = vset.pattern.permute.xlu0 1
    %170 = vperm.xlu0 %169, %v157
    %v171 = vpop.permute.xlu0 %170
    %v173 = vmul.f32 %v171, %v26
    %v174 = vadd.f32 %v168, %v173
    %v175 = vmax.f32 %v174, 0.0
    %176 = vset.pattern.permute.xlu0 3
    %177 = vperm.xlu0 %176, %v157
    %v178 = vpop.permute.xlu0 %177
    %v180 = vmul.f32 %v175, %v178
    %v181 = vadd.f32 %v155, %v180
    %s182 = scalar_lea.vmem %s1, 48
    %v183 = vld [vmem:[%s182] sm:$0xff]
    %185 = vset.pattern.permute.xlu0 0
    %186 = vperm.xlu0 %185, %v183
    %v187 = vpop.permute.xlu0 %186
    %v189 = vmul.f32 %v187, %v21
    %190 = vset.pattern.permute.xlu0 2
    %191 = vperm.xlu0 %190, %v183
    %v192 = vpop.permute.xlu0 %191
    %v194 = vadd.f32 %v192, %v189
    %195 = vset.pattern.permute.xlu0 1
    %196 = vperm.xlu0 %195, %v183
    %v197 = vpop.permute.xlu0 %196
    %v199 = vmul.f32 %v197, %v26
    %v200 = vadd.f32 %v194, %v199
    %v201 = vmax.f32 %v200, 0.0
    %202 = vset.pattern.permute.xlu0 3
    %203 = vperm.xlu0 %202, %v183
    %v204 = vpop.permute.xlu0 %203
    %v206 = vmul.f32 %v201, %v204
    %v207 = vadd.f32 %v181, %v206
    %s208 = scalar_lea.vmem %s1, 56
    %v209 = vld [vmem:[%s208] sm:$0xff]
    %211 = vset.pattern.permute.xlu0 0
    %212 = vperm.xlu0 %211, %v209
    %v213 = vpop.permute.xlu0 %212
    %v215 = vmul.f32 %v213, %v21
    %216 = vset.pattern.permute.xlu0 2
    %217 = vperm.xlu0 %216, %v209
    %v218 = vpop.permute.xlu0 %217
    %v220 = vadd.f32 %v218, %v215
    %221 = vset.pattern.permute.xlu0 1
    %222 = vperm.xlu0 %221, %v209
    %v223 = vpop.permute.xlu0 %222
    %v225 = vmul.f32 %v223, %v26
    %v226 = vadd.f32 %v220, %v225
    %v227 = vmax.f32 %v226, 0.0
    %228 = vset.pattern.permute.xlu0 3
    %229 = vperm.xlu0 %228, %v209
    %v230 = vpop.permute.xlu0 %229
    %v232 = vmul.f32 %v227, %v230
    %v233 = vadd.f32 %v207, %v232
    %s234 = scalar_lea.vmem %s1, 64
    %v235 = vld [vmem:[%s234] sm:$0xff]
    %237 = vset.pattern.permute.xlu0 0
    %238 = vperm.xlu0 %237, %v235
    %v239 = vpop.permute.xlu0 %238
    %v241 = vmul.f32 %v239, %v21
    %242 = vset.pattern.permute.xlu0 2
    %243 = vperm.xlu0 %242, %v235
    %v244 = vpop.permute.xlu0 %243
    %v246 = vadd.f32 %v244, %v241
    %247 = vset.pattern.permute.xlu0 1
    %248 = vperm.xlu0 %247, %v235
    %v249 = vpop.permute.xlu0 %248
    %v251 = vmul.f32 %v249, %v26
    %v252 = vadd.f32 %v246, %v251
    %v253 = vmax.f32 %v252, 0.0
    %254 = vset.pattern.permute.xlu0 3
    %255 = vperm.xlu0 %254, %v235
    %v256 = vpop.permute.xlu0 %255
    %v258 = vmul.f32 %v253, %v256
    %v259 = vadd.f32 %v233, %v258
    %s260 = scalar_lea.vmem %s1, 72
    %v261 = vld [vmem:[%s260] sm:$0xff]
    %263 = vset.pattern.permute.xlu0 0
    %264 = vperm.xlu0 %263, %v261
    %v265 = vpop.permute.xlu0 %264
    %v267 = vmul.f32 %v265, %v21
    %268 = vset.pattern.permute.xlu0 2
    %269 = vperm.xlu0 %268, %v261
    %v270 = vpop.permute.xlu0 %269
    %v272 = vadd.f32 %v270, %v267
    %273 = vset.pattern.permute.xlu0 1
    %274 = vperm.xlu0 %273, %v261
    %v275 = vpop.permute.xlu0 %274
    %v277 = vmul.f32 %v275, %v26
    %v278 = vadd.f32 %v272, %v277
    %v279 = vmax.f32 %v278, 0.0
    %280 = vset.pattern.permute.xlu0 3
    %281 = vperm.xlu0 %280, %v261
    %v282 = vpop.permute.xlu0 %281
    %v284 = vmul.f32 %v279, %v282
    %v285 = vadd.f32 %v259, %v284
    %s286 = scalar_lea.vmem %s1, 80
    %v287 = vld [vmem:[%s286] sm:$0xff]
    %289 = vset.pattern.permute.xlu0 0
    %290 = vperm.xlu0 %289, %v287
    %v291 = vpop.permute.xlu0 %290
    %v293 = vmul.f32 %v291, %v21
    %294 = vset.pattern.permute.xlu0 2
    %295 = vperm.xlu0 %294, %v287
    %v296 = vpop.permute.xlu0 %295
    %v298 = vadd.f32 %v296, %v293
    %299 = vset.pattern.permute.xlu0 1
    %300 = vperm.xlu0 %299, %v287
    %v301 = vpop.permute.xlu0 %300
    %v303 = vmul.f32 %v301, %v26
    %v304 = vadd.f32 %v298, %v303
    %v305 = vmax.f32 %v304, 0.0
    %306 = vset.pattern.permute.xlu0 3
    %307 = vperm.xlu0 %306, %v287
    %v308 = vpop.permute.xlu0 %307
    %v310 = vmul.f32 %v305, %v308
    %v311 = vadd.f32 %v285, %v310
    %s312 = scalar_lea.vmem %s1, 88
    %v313 = vld [vmem:[%s312] sm:$0xff]
    %315 = vset.pattern.permute.xlu0 0
    %316 = vperm.xlu0 %315, %v313
    %v317 = vpop.permute.xlu0 %316
    %v319 = vmul.f32 %v317, %v21
    %320 = vset.pattern.permute.xlu0 2
    %321 = vperm.xlu0 %320, %v313
    %v322 = vpop.permute.xlu0 %321
    %v324 = vadd.f32 %v322, %v319
    %325 = vset.pattern.permute.xlu0 1
    %326 = vperm.xlu0 %325, %v313
    %v327 = vpop.permute.xlu0 %326
    %v329 = vmul.f32 %v327, %v26
    %v330 = vadd.f32 %v324, %v329
    %v331 = vmax.f32 %v330, 0.0
    %332 = vset.pattern.permute.xlu0 3
    %333 = vperm.xlu0 %332, %v313
    %v334 = vpop.permute.xlu0 %333
    %v336 = vmul.f32 %v331, %v334
    %v337 = vadd.f32 %v311, %v336
    %s338 = scalar_lea.vmem %s1, 96
    %v339 = vld [vmem:[%s338] sm:$0xff]
    %341 = vset.pattern.permute.xlu0 0
    %342 = vperm.xlu0 %341, %v339
    %v343 = vpop.permute.xlu0 %342
    %v345 = vmul.f32 %v343, %v21
    %346 = vset.pattern.permute.xlu0 2
    %347 = vperm.xlu0 %346, %v339
    %v348 = vpop.permute.xlu0 %347
    %v350 = vadd.f32 %v348, %v345
    %351 = vset.pattern.permute.xlu0 1
    %352 = vperm.xlu0 %351, %v339
    %v353 = vpop.permute.xlu0 %352
    %v355 = vmul.f32 %v353, %v26
    %v356 = vadd.f32 %v350, %v355
    %v357 = vmax.f32 %v356, 0.0
    %358 = vset.pattern.permute.xlu0 3
    %359 = vperm.xlu0 %358, %v339
    %v360 = vpop.permute.xlu0 %359
    %v362 = vmul.f32 %v357, %v360
    %v363 = vadd.f32 %v337, %v362
    %s364 = scalar_lea.vmem %s1, 104
    %v365 = vld [vmem:[%s364] sm:$0xff]
    %367 = vset.pattern.permute.xlu0 0
    %368 = vperm.xlu0 %367, %v365
    %v369 = vpop.permute.xlu0 %368
    %v371 = vmul.f32 %v369, %v21
    %372 = vset.pattern.permute.xlu0 2
    %373 = vperm.xlu0 %372, %v365
    %v374 = vpop.permute.xlu0 %373
    %v376 = vadd.f32 %v374, %v371
    %377 = vset.pattern.permute.xlu0 1
    %378 = vperm.xlu0 %377, %v365
    %v379 = vpop.permute.xlu0 %378
    %v381 = vmul.f32 %v379, %v26
    %v382 = vadd.f32 %v376, %v381
    %v383 = vmax.f32 %v382, 0.0
    %384 = vset.pattern.permute.xlu0 3
    %385 = vperm.xlu0 %384, %v365
    %v386 = vpop.permute.xlu0 %385
    %v388 = vmul.f32 %v383, %v386
    %v389 = vadd.f32 %v363, %v388
    %s390 = scalar_lea.vmem %s1, 112
    %v391 = vld [vmem:[%s390] sm:$0xff]
    %393 = vset.pattern.permute.xlu0 0
    %394 = vperm.xlu0 %393, %v391
    %v395 = vpop.permute.xlu0 %394
    %v397 = vmul.f32 %v395, %v21
    %398 = vset.pattern.permute.xlu0 2
    %399 = vperm.xlu0 %398, %v391
    %v400 = vpop.permute.xlu0 %399
    %v402 = vadd.f32 %v400, %v397
    %403 = vset.pattern.permute.xlu0 1
    %404 = vperm.xlu0 %403, %v391
    %v405 = vpop.permute.xlu0 %404
    %v407 = vmul.f32 %v405, %v26
    %v408 = vadd.f32 %v402, %v407
    %v409 = vmax.f32 %v408, 0.0
    %410 = vset.pattern.permute.xlu0 3
    %411 = vperm.xlu0 %410, %v391
    %v412 = vpop.permute.xlu0 %411
    %v414 = vmul.f32 %v409, %v412
    %v415 = vadd.f32 %v389, %v414
    %s416 = scalar_lea.vmem %s1, 120
    %v417 = vld [vmem:[%s416] sm:$0xff]
    %419 = vset.pattern.permute.xlu0 0
    %420 = vperm.xlu0 %419, %v417
    %v421 = vpop.permute.xlu0 %420
    %v423 = vmul.f32 %v421, %v21
    %424 = vset.pattern.permute.xlu0 2
    %425 = vperm.xlu0 %424, %v417
    %v426 = vpop.permute.xlu0 %425
    %v428 = vadd.f32 %v426, %v423
    %429 = vset.pattern.permute.xlu0 1
    %430 = vperm.xlu0 %429, %v417
    %v431 = vpop.permute.xlu0 %430
    %v433 = vmul.f32 %v431, %v26
    %v434 = vadd.f32 %v428, %v433
    %v435 = vmax.f32 %v434, 0.0
    %436 = vset.pattern.permute.xlu0 3
    %437 = vperm.xlu0 %436, %v417
    %v438 = vpop.permute.xlu0 %437
    %v440 = vmul.f32 %v435, %v438
    %v441 = vadd.f32 %v415, %v440
    %v442 = vrot.slane %v441, 4
    %v443 = vadd.f32 %v441, %v442
    %v444 = vrot.slane %v443, 2
    %v445 = vadd.f32 %v443, %v444
    %v446 = vrot.slane %v445, 1
    %v447 = vadd.f32 %v445, %v446
    %v448 = vstv %s16
    %v449 = vadd.f32 %v447, %v448
    %450 = vst [vmem:[#allocation3] sm:$0x1] %v449
    // Predicated region
    $region14: #{tpu_custom_call.1} parent=1 // pred_check
      _
    $region15: #{tpu_custom_call.1} parent=1 // pred_check_branch
      %452 = sbr.rel (0) target = $region17
    $region16: #{tpu_custom_call.1} parent=1 // pred_region
      %s454 = ssub.s32 16, 16
      %455 = vsyncadd [#allocation4], %s454
      %s457 = sshll.u32 [#allocation3], 4
      %s458 = int_to_ptr.vmem [resolvable:$true] %s457
      %460 = dma.vmem_to_hbm [thread:$0]  %s458, 16, %s3, [#allocation4]
    $region17: #{tpu_custom_call.1} parent=1 // pred_fallthru
      _
    // Predicated region
    $region18: #{tpu_custom_call.1} parent=1 // pred_check
      _
    $region19: #{tpu_custom_call.1} parent=1 // pred_check_branch
      %462 = sbr.rel (0) target = $region21
    $region20: #{tpu_custom_call.1} parent=1 // pred_region
      %463 = dma.done [#allocation4], 16
    $region21: #{tpu_custom_call.1} parent=1 // pred_fallthru
      _
    %464 = vsyncpa [#allocation4], 1

</llo_original>
